<compile_context>
chip_gen: v5e
topology: v5e:2x2
jax: 0.10.0
libtpu: 0.0.40
codegen_flags: <defaults>
</compile_context>

<pallas_src>
import jax
import jax.numpy as jnp
from jax import lax
from jax.experimental import pallas as pl
from jax.experimental.pallas import tpu as pltpu
import numpy as np

# --------------------- problem sizes (small, module-consistent) --------------
N = 2                 # batch
C_IN = 16             # in_channels
OUT_CH = 4            # out_channels -> mid_channels = 4
C_MID = OUT_CH
C_OUT = OUT_CH * 4    # expansion = 4; equals C_IN so downsample=None (identity)
H = W = 8
EPS = 1e-5

WCI = W * C_IN        # 128  lane width of input / residual
WCM = W * C_MID       # 32   lane width of mid activations
WCO = W * C_OUT       # 128  lane width of output

# packed-parameter slab layout (row offsets)
P32_W1 = 0                      # conv1 block-diag weight   rows [0, WCI)
P32_W2 = WCI                    # conv2 K-concat weight     rows [WCI, WCI+3*WCM)
P32_B1 = WCI + 3 * WCM          # conv1 folded-BN bias row
P32_B2 = P32_B1 + 1             # conv2 folded-BN bias row
P32_ROWS = P32_B2 + 1           # 226
P128_W3 = 0                     # conv3 block-diag weight   rows [0, WCM)
P128_B3 = WCM                   # conv3 folded-BN bias row
P128_ROWS = P128_B3 + 1         # 33


# ------------------------------ Pallas kernel --------------------------------
def bottleneck_kernel(x_ref, p32_ref, p128_ref, out_ref):
    R = x_ref.shape[0]                        # rows in this tile (multiple of H)
    x = x_ref[...]                            # (R, WCI) f32 (kept f32 for residual)

    # Static slices into the packed bf16 parameter slabs (no extra DMAs).
    w1 = p32_ref[P32_W1:P32_W1 + WCI, :]                        # (WCI, WCM) bf16
    w2 = p32_ref[P32_W2:P32_W2 + 3 * WCM, :]                    # (3*WCM, WCM) bf16
    b1 = p32_ref[P32_B1:P32_B1 + 1, :].astype(jnp.float32)      # (1, WCM)
    b2 = p32_ref[P32_B2:P32_B2 + 1, :].astype(jnp.float32)      # (1, WCM)
    w3 = p128_ref[P128_W3:P128_W3 + WCM, :]                     # (WCM, WCO) bf16
    b3 = p128_ref[P128_B3:P128_B3 + 1, :].astype(jnp.float32)   # (1, WCO)

    # conv1 (1x1) + folded-BN bias + ReLU
    h1 = jnp.dot(x.astype(jnp.bfloat16), w1, preferred_element_type=jnp.float32)
    h1 = jnp.maximum(h1 + b1, 0.0)            # (R, WCM) f32

    # conv2 (3x3, stride=1, pad=1) as ONE matmul:
    #   * kx taps + width zero-padding live in the block-tridiagonal weight,
    #   * ky taps are realized with sublane rolls (XLU) + boundary masks (VPU)
    #     and a K-concatenation, so the MXU sees a single
    #     (R, 3*WCM) @ (3*WCM, WCM) contraction.
    row = lax.broadcasted_iota(jnp.int32, (R, WCM), 0)
    hrow = row % H                                              # row within image
    up = jnp.where(hrow == 0, 0.0, pltpu.roll(h1, 1, 0))        # reads row h-1
    dn = jnp.where(hrow == H - 1, 0.0, pltpu.roll(h1, R - 1, 0))  # reads row h+1
    h1s = jnp.concatenate([up, h1, dn], axis=1).astype(jnp.bfloat16)  # (R, 3*WCM)
    h2 = jnp.dot(h1s, w2, preferred_element_type=jnp.float32)
    h2 = jnp.maximum(h2 + b2, 0.0)            # (R, WCM) f32

    # conv3 (1x1) + folded-BN bias + identity residual + ReLU (lane-dense store)
    h3 = jnp.dot(h2.astype(jnp.bfloat16), w3, preferred_element_type=jnp.float32)
    out_ref[...] = jnp.maximum(h3 + b3 + x, 0.0)                # (R, WCO) f32


# -------------------------------- wrappers ------------------------------------
def bottleneck_forward_2d(x2d, kernel_params):
    """Core entry point on the lane-dense (N*H, W*C_IN) activation slab."""
    p32, p128 = kernel_params
    total_rows = x2d.shape[0]
    n_imgs = total_rows // H
    imgs_per_step = max(1, min(n_imgs, 128 // H))   # target <=128 rows per step
    while n_imgs % imgs_per_step:
        imgs_per_step -= 1
    rows = imgs_per_step * H
    grid = (n_imgs // imgs_per_step,)

    flops = 2 * total_rows * (WCI * WCM + 3 * WCM * WCM + WCM * WCO)
    bytes_accessed = (x2d.size * 4 + total_rows * WCO * 4
                      + p32.size * 2 + p128.size * 2)

    return pl.pallas_call(
        bottleneck_kernel,
        out_shape=jax.ShapeDtypeStruct((total_rows, WCO), jnp.float32),
        grid=grid,
        in_specs=[
            pl.BlockSpec((rows, WCI), lambda i: (i, 0)),
            pl.BlockSpec((P32_ROWS, WCM), lambda i: (0, 0)),    # resident weights
            pl.BlockSpec((P128_ROWS, WCO), lambda i: (0, 0)),   # resident weights
        ],
        out_specs=pl.BlockSpec((rows, WCO), lambda i: (i, 0)),
        compiler_params=pltpu.CompilerParams(
            dimension_semantics=("parallel",)),  # image-group axis (v7x megacore)
        cost_estimate=pl.CostEstimate(flops=flops, transcendentals=0,
                                      bytes_accessed=bytes_accessed),
    )(x2d, p32, p128)


def bottleneck_forward(x_nchw, kernel_params):
    """NCHW convenience wrapper. Between stacked blocks use
    bottleneck_forward_2d directly so the layout conversion is paid once at
    network boundaries only."""
    n = x_nchw.shape[0]
    x2d = jnp.transpose(x_nchw, (0, 2, 3, 1)).reshape(n * H, WCI)
    out2d = bottleneck_forward_2d(x2d, kernel_params)
    return jnp.transpose(out2d.reshape(n, H, W, C_OUT), (0, 3, 1, 2))


# --------------------------- parameter construction ---------------------------
def make_params(key):
    ks = jax.random.split(key, 15)
    # conv weights in channel-matmul layout:
    #   w1: [C_in, C_mid], w2: [9, C_mid, C_mid] (tap-major ky*3+kx, in, out),
    #   w3: [C_mid, C_out]
    w1 = jax.random.normal(ks[0], (C_IN, C_MID), jnp.float32) / np.sqrt(C_IN)
    w2 = jax.random.normal(ks[1], (9, C_MID, C_MID), jnp.float32) / np.sqrt(9 * C_MID)
    w3 = jax.random.normal(ks[2], (C_MID, C_OUT), jnp.float32) / np.sqrt(C_MID)

    def bn(kg, kb, km, kv, c):
        gamma = 1.0 + 0.1 * jax.random.normal(kg, (c,), jnp.float32)
        beta = 0.1 * jax.random.normal(kb, (c,), jnp.float32)
        mean = 0.1 * jax.random.normal(km, (c,), jnp.float32)
        var = jnp.abs(1.0 + 0.1 * jax.random.normal(kv, (c,), jnp.float32))
        scale = gamma / jnp.sqrt(var + EPS)       # inference-mode BN folded
        bias = beta - mean * scale
        return scale.reshape(1, -1), bias.reshape(1, -1)

    s1, b1 = bn(ks[3], ks[4], ks[5], ks[6], C_MID)
    s2, b2 = bn(ks[7], ks[8], ks[9], ks[10], C_MID)
    s3, b3 = bn(ks[11], ks[12], ks[13], ks[14], C_OUT)
    return (w1, s1, b1, w2, s2, b2, w3, s3, b3)


def prepare_kernel_params(params):
    """One-time weight prep: fold BN scales into conv weights, build the
    lane-dense (w-major, c-minor) block matrices, K-concat the 3x3 ky taps,
    and pack everything into two bf16 VMEM slabs (2 parameter DMAs/call)."""
    (w1, s1, b1, w2, s2, b2, w3, s3, b3) = [np.asarray(p, np.float32) for p in params]
    s1, b1 = s1.reshape(-1), b1.reshape(-1)
    s2, b2 = s2.reshape(-1), b2.reshape(-1)
    s3, b3 = s3.reshape(-1), b3.reshape(-1)

    # Fold BN scales into conv output channels (zero runtime cost).
    w1f = w1 * s1[None, :]                       # [C_IN,  C_MID]
    w2f = w2 * s2[None, None, :]                 # [9, C_MID, C_MID]
    w3f = w3 * s3[None, :]                       # [C_MID, C_OUT]

    # conv1: block-diagonal over w -> (W*C_IN, W*C_MID)
    w1_blk = np.zeros((WCI, WCM), np.float32)
    for w in range(W):
        w1_blk[w * C_IN:(w + 1) * C_IN, w * C_MID:(w + 1) * C_MID] = w1f

    # conv2: per-ky block-tridiagonal over w (kx taps + width zero-padding
    # folded in), K-concatenated over ky -> (3*W*C_MID, W*C_MID)
    w2_cat = np.zeros((3 * WCM, WCM), np.float32)
    for ky in range(3):
        for kx in range(3):
            for w in range(W):
                wi = w + kx - 1
                if 0 <= wi < W:
                    w2_cat[ky * WCM + wi * C_MID: ky * WCM + (wi + 1) * C_MID,
                           w * C_MID:(w + 1) * C_MID] = w2f[ky * 3 + kx]

    # conv3: block-diagonal over w -> (W*C_MID, W*C_OUT)
    w3_blk = np.zeros((WCM, WCO), np.float32)
    for w in range(W):
        w3_blk[w * C_MID:(w + 1) * C_MID, w * C_OUT:(w + 1) * C_OUT] = w3f

    # Pack into two contiguous slabs; biases broadcast per pixel (w-major).
    p32 = np.zeros((P32_ROWS, WCM), np.float32)
    p32[P32_W1:P32_W1 + WCI] = w1_blk
    p32[P32_W2:P32_W2 + 3 * WCM] = w2_cat
    p32[P32_B1] = np.tile(b1, W)
    p32[P32_B2] = np.tile(b2, W)

    p128 = np.zeros((P128_ROWS, WCO), np.float32)
    p128[P128_W3:P128_W3 + WCM] = w3_blk
    p128[P128_B3] = np.tile(b3, W)

    # bf16 storage: MXU-native on v6e/v7x and half the weight DMA bytes.
    return (jnp.asarray(p32, dtype=jnp.bfloat16),
            jnp.asarray(p128, dtype=jnp.bfloat16))


# ------------------------------ JAX reference ---------------------------------
def reference_forward(x_nchw, params):
    (w1, s1, b1, w2, s2, b2, w3, s3, b3) = params
    hp = lax.Precision.HIGHEST
    x = jnp.transpose(x_nchw, (0, 2, 3, 1))
    h1 = jnp.maximum(jnp.einsum('nhwc,cd->nhwd', x, w1, precision=hp) * s1 + b1, 0.0)
    w2_hwio = w2.reshape(3, 3, C_MID, C_MID)
    h1c = lax.conv_general_dilated(h1, w2_hwio, (1, 1), 'SAME',
                                   dimension_numbers=('NHWC', 'HWIO', 'NHWC'),
                                   precision=hp)
    h2 = jnp.maximum(h1c * s2 + b2, 0.0)
    h3 = jnp.einsum('nhwc,cd->nhwd', h2, w3, precision=hp) * s3 + b3
    out = jnp.maximum(h3 + x, 0.0)
    return jnp.transpose(out, (0, 3, 1, 2))


# ----------------------------------- main --------------------------------------
if __name__ == "__main__":
    key = jax.random.PRNGKey(0)
    k_x, k_p = jax.random.split(key)
    x = jax.random.normal(k_x, (N, C_IN, H, W), jnp.float32)
    params = make_params(k_p)
    kparams = prepare_kernel_params(params)

    out = jax.block_until_ready(bottleneck_forward(x, kparams))
    ref = jax.block_until_ready(reference_forward(x, params))

    assert out.shape == (N, C_OUT, H, W)
    np.testing.assert_allclose(np.asarray(out), np.asarray(ref),
                               rtol=2e-2, atol=2e-2)
    print("KERNEL_OK")
</pallas_src>

<mosaic_0001>
module attributes {stable_mosaic.version = 11 : i64} {
  func.func @bottleneck_kernel(%arg0: i32, %arg1: memref<16x128xf32, #tpu.memory_space<vmem>>, %arg2: memref<226x32xbf16, #tpu.memory_space<vmem>>, %arg3: memref<33x128xbf16, #tpu.memory_space<vmem>>, %arg4: memref<16x128xf32, #tpu.memory_space<vmem>>) attributes {dimension_semantics = [#tpu.dimension_semantics<parallel>], iteration_bounds = array<i64: 1>, scalar_prefetch = 0 : i64, scratch_operands = 0 : i64, tpu.core_type = #tpu.core_type<tc>, window_params = [{transform_indices = @transform_0, window_bounds = array<i64: 16, 128>}, {pipeline_mode = #tpu.pipeline_mode<synchronous>, transform_indices = @transform_1, window_bounds = array<i64: 226, 32>}, {pipeline_mode = #tpu.pipeline_mode<synchronous>, transform_indices = @transform_2, window_bounds = array<i64: 33, 128>}, {transform_indices = @transform_3, window_bounds = array<i64: 16, 128>}]} {
    %c0 = arith.constant 0 : index
    %c0_0 = arith.constant 0 : index
    %0 = vector.load %arg1[%c0, %c0_0] : memref<16x128xf32, #tpu.memory_space<vmem>>, vector<16x128xf32>
    %c0_1 = arith.constant 0 : index
    %c0_2 = arith.constant 0 : index
    %1 = vector.load %arg2[%c0_1, %c0_2] : memref<226x32xbf16, #tpu.memory_space<vmem>>, vector<128x32xbf16>
    %c128 = arith.constant 128 : index
    %c0_3 = arith.constant 0 : index
    %2 = vector.load %arg2[%c128, %c0_3] : memref<226x32xbf16, #tpu.memory_space<vmem>>, vector<96x32xbf16>
    %c224 = arith.constant 224 : index
    %c0_4 = arith.constant 0 : index
    %3 = vector.load %arg2[%c224, %c0_4] : memref<226x32xbf16, #tpu.memory_space<vmem>>, vector<1x32xbf16>
    %4 = arith.extf %3 : vector<1x32xbf16> to vector<1x32xf32>
    %c225 = arith.constant 225 : index
    %c0_5 = arith.constant 0 : index
    %5 = vector.load %arg2[%c225, %c0_5] : memref<226x32xbf16, #tpu.memory_space<vmem>>, vector<1x32xbf16>
    %6 = arith.extf %5 : vector<1x32xbf16> to vector<1x32xf32>
    %c0_6 = arith.constant 0 : index
    %c0_7 = arith.constant 0 : index
    %7 = vector.load %arg3[%c0_6, %c0_7] : memref<33x128xbf16, #tpu.memory_space<vmem>>, vector<32x128xbf16>
    %c32 = arith.constant 32 : index
    %c0_8 = arith.constant 0 : index
    %8 = vector.load %arg3[%c32, %c0_8] : memref<33x128xbf16, #tpu.memory_space<vmem>>, vector<1x128xbf16>
    %9 = arith.extf %8 : vector<1x128xbf16> to vector<1x128xf32>
    %10 = arith.truncf %0 : vector<16x128xf32> to vector<16x128xbf16>
    %cst = arith.constant dense<0.000000e+00> : vector<16x32xf32>
    %11 = tpu.matmul %10, %1, %cst {dimension_numbers = #tpu.dot_dimension_numbers<[1], [0], [0], [1], [0, 0, 1, 1], [], []>} : vector<16x128xbf16>, vector<128x32xbf16>, vector<16x32xf32> -> vector<16x32xf32>
    %12 = vector.broadcast %4 : vector<1x32xf32> to vector<16x32xf32>
    %13 = arith.addf %11, %12 : vector<16x32xf32>
    %cst_9 = arith.constant 0.000000e+00 : f32
    %14 = vector.broadcast %cst_9 : f32 to vector<16x32xf32>
    %15 = arith.maximumf %13, %14 : vector<16x32xf32>
    %16 = tpu.iota {dimensions = array<i32: 0>} : vector<16x32xi32>
    %c8_i32 = arith.constant 8 : i32
    %c0_i32 = arith.constant 0 : i32
    %17 = arith.cmpi eq, %c8_i32, %c0_i32 : i32
    %c1_i32 = arith.constant 1 : i32
    %18 = arith.select %17, %c1_i32, %c8_i32 : i32
    %19 = vector.broadcast %18 : i32 to vector<16x32xi32>
    %20 = arith.remsi %16, %19 : vector<16x32xi32>
    %c0_i32_10 = arith.constant 0 : i32
    %21 = vector.broadcast %c0_i32_10 : i32 to vector<16x32xi32>
    %22 = arith.cmpi ne, %20, %21 : vector<16x32xi32>
    %c0_i32_11 = arith.constant 0 : i32
    %23 = vector.broadcast %c0_i32_11 : i32 to vector<16x32xi32>
    %24 = arith.cmpi slt, %20, %23 : vector<16x32xi32>
    %c0_i32_12 = arith.constant 0 : i32
    %25 = arith.cmpi slt, %18, %c0_i32_12 : i32
    %26 = vector.broadcast %25 : i1 to vector<16x32xi1>
    %27 = vector.broadcast %26 : vector<16x32xi1> to vector<16x32xi1>
    %28 = arith.xori %24, %27 : vector<16x32xi1>
    %29 = arith.andi %28, %22 : vector<16x32xi1>
    %30 = vector.broadcast %18 : i32 to vector<16x32xi32>
    %31 = arith.addi %20, %30 : vector<16x32xi32>
    %32 = arith.select %29, %31, %20 : vector<16x32xi1>, vector<16x32xi32>
    %c0_i32_13 = arith.constant 0 : i32
    %33 = vector.broadcast %c0_i32_13 : i32 to vector<16x32xi32>
    %34 = arith.cmpi eq, %32, %33 : vector<16x32xi32>
    %c1_i32_14 = arith.constant 1 : i32
    %35 = tpu.dynamic_rotate %15 by %c1_i32_14 dim 0 : vector<16x32xf32>, i32 -> vector<16x32xf32>
    %cst_15 = arith.constant 0.000000e+00 : f32
    %36 = vector.broadcast %cst_15 : f32 to vector<16x32xf32>
    %37 = arith.select %34, %36, %35 : vector<16x32xi1>, vector<16x32xf32>
    %c7_i32 = arith.constant 7 : i32
    %38 = vector.broadcast %c7_i32 : i32 to vector<16x32xi32>
    %39 = arith.cmpi eq, %32, %38 : vector<16x32xi32>
    %c15_i32 = arith.constant 15 : i32
    %40 = tpu.dynamic_rotate %15 by %c15_i32 dim 0 : vector<16x32xf32>, i32 -> vector<16x32xf32>
    %cst_16 = arith.constant 0.000000e+00 : f32
    %41 = vector.broadcast %cst_16 : f32 to vector<16x32xf32>
    %42 = arith.select %39, %41, %40 : vector<16x32xi1>, vector<16x32xf32>
    %43 = tpu.concatenate %37, %15, %42 in 1 : vector<16x32xf32>, vector<16x32xf32>, vector<16x32xf32> -> vector<16x96xf32>
    %44 = arith.truncf %43 : vector<16x96xf32> to vector<16x96xbf16>
    %cst_17 = arith.constant dense<0.000000e+00> : vector<16x32xf32>
    %45 = tpu.matmul %44, %2, %cst_17 {dimension_numbers = #tpu.dot_dimension_numbers<[1], [0], [0], [1], [0, 0, 1, 1], [], []>} : vector<16x96xbf16>, vector<96x32xbf16>, vector<16x32xf32> -> vector<16x32xf32>
    %46 = vector.broadcast %6 : vector<1x32xf32> to vector<16x32xf32>
    %47 = arith.addf %45, %46 : vector<16x32xf32>
    %cst_18 = arith.constant 0.000000e+00 : f32
    %48 = vector.broadcast %cst_18 : f32 to vector<16x32xf32>
    %49 = arith.maximumf %47, %48 : vector<16x32xf32>
    %50 = arith.truncf %49 : vector<16x32xf32> to vector<16x32xbf16>
    %cst_19 = arith.constant dense<0.000000e+00> : vector<16x128xf32>
    %51 = tpu.matmul %50, %7, %cst_19 {dimension_numbers = #tpu.dot_dimension_numbers<[1], [0], [0], [1], [0, 0, 1, 1], [], []>} : vector<16x32xbf16>, vector<32x128xbf16>, vector<16x128xf32> -> vector<16x128xf32>
    %52 = vector.broadcast %9 : vector<1x128xf32> to vector<16x128xf32>
    %53 = arith.addf %51, %52 : vector<16x128xf32>
    %54 = arith.addf %53, %0 : vector<16x128xf32>
    %cst_20 = arith.constant 0.000000e+00 : f32
    %55 = vector.broadcast %cst_20 : f32 to vector<16x128xf32>
    %56 = arith.maximumf %54, %55 : vector<16x128xf32>
    %c0_21 = arith.constant 0 : index
    %c0_22 = arith.constant 0 : index
    %57 = vector.load %arg4[%c0_21, %c0_22] : memref<16x128xf32, #tpu.memory_space<vmem>>, vector<16x128xf32>
    tpu.vector_store %arg4[%c0_21, %c0_22], %56 {strides = array<i32>} : memref<16x128xf32, #tpu.memory_space<vmem>>, vector<16x128xf32>,
    return
  }
  func.func @transform_0(%arg0: i32) -> (i32, i32) {
    %c0_i32 = arith.constant 0 : i32
    %c0_i32_0 = arith.constant 0 : i32
    return %arg0, %c0_i32 : i32, i32
  }
  func.func @transform_1(%arg0: i32) -> (i32, i32) {
    %c0_i32 = arith.constant 0 : i32
    %c0_i32_0 = arith.constant 0 : i32
    %c0_i32_1 = arith.constant 0 : i32
    return %c0_i32, %c0_i32_0 : i32, i32
  }
  func.func @transform_2(%arg0: i32) -> (i32, i32) {
    %c0_i32 = arith.constant 0 : i32
    %c0_i32_0 = arith.constant 0 : i32
    %c0_i32_1 = arith.constant 0 : i32
    return %c0_i32, %c0_i32_0 : i32, i32
  }
  func.func @transform_3(%arg0: i32) -> (i32, i32) {
    %c0_i32 = arith.constant 0 : i32
    %c0_i32_0 = arith.constant 0 : i32
    return %arg0, %c0_i32 : i32, i32
  }
}

</mosaic_0001>

<llo_original>
// kernel: tpu_custom_call.1
$region0: #{tpu_custom_call.1}
  #allocation0 [shape = 'u32[]', space=smem, size = 0x4, offset = 0x4, fixed_abs, tag = 'smem constant byte address 0x4 - core index']
  #allocation1 [shape = 'u32[72,128]{1,0:T(1,128)}', space=vmem, size = 0x9000, scoped, tag = 'internal scratch']
  %s0 = inlined_call_operand.vmem [shape: f32[16,128], index: 0, kind: input, shape index: {}]
  %s1 = inlined_call_operand.vmem [shape: bf16[226,32], index: 1, kind: input, shape index: {}]
  %s2 = inlined_call_operand.vmem [shape: bf16[33,128], index: 2, kind: input, shape index: {}]
  %s3 = inlined_call_operand.hbm [shape: f32[16,128], index: 3, kind: output, shape index: {}]
  %s4 = sld [smem:[#allocation0]]
  $region22: #{tpu_custom_call.1} parent=0
    _
  %s6 = ssub.s32 1, %s4
  %s7 = scalar_select 0, %s6, %s4
  $region1: #{tpu_custom_call.1} parent=0
    #allocation2 [shape = 'u8[8192]{0}', space=vmem, size = 0x2000, scoped, tag = 'output window, operand 0, single buffered']
    #allocation3 [shape = 's32[1]{0}', space=sflag, size = 0x4, scoped, tag = 'scoped memory for tpu_custom_call.1']
    %8 = vsyncpa [#allocation3], 0
    // Predicated region
    $region2: #{tpu_custom_call.1} parent=1 // pred_check
      _
    $region3: #{tpu_custom_call.1} parent=1 // pred_check_branch
      %10 = sbr.rel (0) target = $region5
    $region4: #{tpu_custom_call.1} parent=1 // pred_region
      _
    $region5: #{tpu_custom_call.1} parent=1 // pred_fallthru
      _
    // Predicated region
    $region6: #{tpu_custom_call.1} parent=1 // pred_check
      _
    $region7: #{tpu_custom_call.1} parent=1 // pred_check_branch
      %12 = sbr.rel (0) target = $region9
    $region8: #{tpu_custom_call.1} parent=1 // pred_region
      _
    $region9: #{tpu_custom_call.1} parent=1 // pred_fallthru
      _
    // Predicated region
    $region10: #{tpu_custom_call.1} parent=1 // pred_check
      _
    $region11: #{tpu_custom_call.1} parent=1 // pred_check_branch
      %14 = sbr.rel (0) target = $region13
    $region12: #{tpu_custom_call.1} parent=1 // pred_region
      _
    $region13: #{tpu_custom_call.1} parent=1 // pred_fallthru
      _
    %v16 = vld [vmem:[%s0] sm:$0xff]
    %v17 = vld [vmem:[%s0 + $0x8] sm:$0xff]
    %v18 = vld [vmem:[%s1] sm:$0xf]
    %v19 = vld [vmem:[%s1 + $0x4] sm:$0xf]
    %v20 = vld [vmem:[%s1 + $0x8] sm:$0xf]
    %v21 = vld [vmem:[%s1 + $0xc] sm:$0xf]
    %v22 = vld [vmem:[%s1 + $0x10] sm:$0xf]
    %v23 = vld [vmem:[%s1 + $0x14] sm:$0xf]
    %v24 = vld [vmem:[%s1 + $0x18] sm:$0xf]
    %v25 = vld [vmem:[%s1 + $0x1c] sm:$0xf]
    %v26 = vld [vmem:[%s1 + $0x20] sm:$0xf]
    %v27 = vld [vmem:[%s1 + $0x24] sm:$0xf]
    %v28 = vld [vmem:[%s1 + $0x28] sm:$0xf]
    %v29 = vld [vmem:[%s1 + $0x2c] sm:$0xf]
    %v30 = vld [vmem:[%s1 + $0x30] sm:$0xf]
    %v31 = vld [vmem:[%s1 + $0x34] sm:$0xf]
    %v32 = vld [vmem:[%s1 + $0x38] sm:$0xf]
    %v33 = vld [vmem:[%s1 + $0x3c] sm:$0xf]
    %v34 = vld [vmem:[%s1 + $0x40] sm:$0xf]
    %v35 = vld [vmem:[%s1 + $0x44] sm:$0xf]
    %v36 = vld [vmem:[%s1 + $0x48] sm:$0xf]
    %v37 = vld [vmem:[%s1 + $0x4c] sm:$0xf]
    %v38 = vld [vmem:[%s1 + $0x50] sm:$0xf]
    %v39 = vld [vmem:[%s1 + $0x54] sm:$0xf]
    %v40 = vld [vmem:[%s1 + $0x58] sm:$0xf]
    %v41 = vld [vmem:[%s1 + $0x5c] sm:$0xf]
    %v42 = vld [vmem:[%s1 + $0x60] sm:$0xf]
    %v43 = vld [vmem:[%s1 + $0x64] sm:$0xf]
    %v44 = vld [vmem:[%s1 + $0x68] sm:$0xf]
    %v45 = vld [vmem:[%s1 + $0x6c] sm:$0xf]
    %v46 = vld [vmem:[%s1 + $0x70] sm:$0x1]
    %v47 = vunpack.c.l.bf16 %v46
    %v48 = vld [vmem:[%s2] sm:$0xf]
    %v49 = vld [vmem:[%s2 + $0x4] sm:$0xf]
    %v50 = vld [vmem:[%s2 + $0x8] sm:$0xf]
    %v51 = vld [vmem:[%s2 + $0xc] sm:$0xf]
    %v52 = vld [vmem:[%s2 + $0x10] sm:$0x1]
    %v53 = vunpack.c.l.bf16 %v52
    %v54 = vpack.c.bf16 %v17, %v16
    %v55 = vperm.slane %v47, 0
    %v72 = vunpack.c.l.b16 %v18
    %v73 = vunpack.c.l.b16 %v19
    %v74 = vunpack.c.l.b16 %v20
    %v75 = vunpack.c.l.b16 %v21
    %v76 = vunpack.c.l.b16 %v22
    %v77 = vunpack.c.l.b16 %v23
    %v78 = vunpack.c.l.b16 %v24
    %v79 = vunpack.c.l.b16 %v25
    %v80 = vunpack.c.l.b16 %v26
    %v81 = vunpack.c.l.b16 %v27
    %v82 = vunpack.c.l.b16 %v28
    %v83 = vunpack.c.l.b16 %v29
    %v84 = vunpack.c.l.b16 %v30
    %v85 = vunpack.c.l.b16 %v31
    %v86 = vunpack.c.l.b16 %v32
    %v87 = vunpack.c.l.b16 %v33
    %v88 = vpack.c.b16 %v73, %v72
    %v89 = vpack.c.b16 %v75, %v74
    %v90 = vpack.c.b16 %v77, %v76
    %v91 = vpack.c.b16 %v79, %v78
    %v92 = vpack.c.b16 %v81, %v80
    %v93 = vpack.c.b16 %v83, %v82
    %v94 = vpack.c.b16 %v85, %v84
    %v95 = vpack.c.b16 %v87, %v86
    %104 = vmatpush.bf16.msra.mxu0 %v95
    %105 = vmatpush.bf16.msra.mxu0 %v94
    %106 = vmatpush.bf16.msra.mxu0 %v93
    %107 = vmatpush.bf16.msra.mxu0 %v92
    %108 = vmatpush.bf16.msra.mxu0 %v91
    %109 = vmatpush.bf16.msra.mxu0 %v90
    %110 = vmatpush.bf16.msra.mxu0 %v89
    %111 = vmatpush.bf16.msra.mxu0 %v88
    %112 = vmatmul.bf16.gmra.mxu0 %v54
    %v113 = vpop.f32.mrf.mxu0
    %v114 = vadd.f32 %v55, %v113
    %v115 = vpop.f32.mrf.mxu0
    %v116 = vadd.f32 %v55, %v115
    %117 = vdwg.mxu0
    %v118 = vmax.f32 %v114, 0.0
    %v119 = vmax.f32 %v116, 0.0
    %v120 = vlaneseq
    %v121 = vshrl.u32 %v120, 7
    %v122 = vadd.s32 %v121, 8
    %vm123 = vcmp.lt.s32.totalorder %v121, 0
    %v124 = vsub.s32 0, %v121
    %v125 = vsel %vm123, %v124, %v121
    %v126 = vshrl.u32 %v125, 3
    %v127 = vand.u32 %v125, 7
    %v128 = vsub.s32 0, %v127
    %v129 = vsel %vm123, %v128, %v127
    %vm130 = vcmp.lt.s32.totalorder %v122, 0
    %v131 = vsub.s32 0, %v122
    %v132 = vsel %vm130, %v131, %v122
    %v133 = vshrl.u32 %v132, 3
    %v134 = vand.u32 %v132, 7
    %v135 = vsub.s32 0, %v134
    %v136 = vsel %vm130, %v135, %v134
    %vm137 = vcmp.ne.s32.totalorder %v129, 0
    %vm138 = vcmp.ne.s32.totalorder %v136, 0
    %vm139 = vcmp.lt.s32.totalorder %v129, 0
    %vm140 = vcmp.lt.s32.totalorder %v136, 0
    %vm141 = vmand %vm139, %vm137
    %vm142 = vmand %vm140, %vm138
    %v143 = vadd.s32 %v129, 8
    %v144 = vadd.s32 %v136, 8
    %v145 = vsel %vm141, %v143, %v129
    %v146 = vsel %vm142, %v144, %v136
    %vm147 = vcmp.eq.s32.totalorder %v145, 0
    %vm148 = vcmp.eq.s32.totalorder %v146, 0
    %v149 = vrot.slane %v118, 7
    %v150 = vrot.slane %v119, 7
    %vm151 = vcmp.lt.s32.totalorder %v121, 1
    %v152 = vsel %vm151, %v149, %v150
    %v153 = vsel %vm151, %v150, %v149
    %v154 = vsel %vm147, 0.0, %v153
    %v155 = vsel %vm148, 0.0, %v152
    %vm156 = vcmp.eq.s32.totalorder %v145, 7
    %vm157 = vcmp.eq.s32.totalorder %v146, 7
    %v158 = vrot.slane %v118, 1
    %v159 = vrot.slane %v119, 1
    %vm160 = vcmp.lt.s32.totalorder %v121, 7
    %v161 = vsel %vm160, %v158, %v159
    %v162 = vsel %vm160, %v159, %v158
    %v163 = vsel %vm156, 0.0, %v161
    %v164 = vsel %vm157, 0.0, %v162
    %167 = vrot.lane.b32.xlu0 %v118, 32
    %v168 = vpop.permute.xlu0 %167
    %169 = vrot.lane.b32.xlu0 %v119, 32
    %v170 = vpop.permute.xlu0 %169
    %175 = vrot.lane.b32.xlu0 %v163, 64
    %v176 = vpop.permute.xlu0 %175
    %177 = vrot.lane.b32.xlu0 %v164, 64
    %v178 = vpop.permute.xlu0 %177
    %vm181 = vcmask 261120
    %v182 = vsel %vm181, %v154, %v168
    %v183 = vsel %vm181, %v155, %v170
    %vm184 = vcmask 523264
    %v185 = vsel %vm184, %v182, %v176
    %v186 = vsel %vm184, %v183, %v178
    %v187 = vpack.c.bf16 %v186, %v185
    %v188 = vperm.slane %v47, 1
    %v201 = vunpack.c.l.b16 %v34
    %v202 = vunpack.c.l.b16 %v35
    %v203 = vunpack.c.l.b16 %v36
    %v204 = vunpack.c.l.b16 %v37
    %v205 = vunpack.c.l.b16 %v38
    %v206 = vunpack.c.l.b16 %v39
    %v207 = vunpack.c.l.b16 %v40
    %v208 = vunpack.c.l.b16 %v41
    %v209 = vunpack.c.l.b16 %v42
    %v210 = vunpack.c.l.b16 %v43
    %v211 = vunpack.c.l.b16 %v44
    %v212 = vunpack.c.l.b16 %v45
    %v213 = vpack.c.b16 %v202, %v201
    %v214 = vpack.c.b16 %v204, %v203
    %v215 = vpack.c.b16 %v206, %v205
    %v216 = vpack.c.b16 %v208, %v207
    %v217 = vpack.c.b16 %v210, %v209
    %v218 = vpack.c.b16 %v212, %v211
    %vm225 = vcmask 785408
    %v227 = vsel %vm225, %v187, 0
    %229 = vmatpush.bf16.msra.mxu0 0
    %230 = vmatpush.bf16.msra.mxu0 0
    %231 = vmatpush.bf16.msra.mxu0 %v218
    %232 = vmatpush.bf16.msra.mxu0 %v217
    %233 = vmatpush.bf16.msra.mxu0 %v216
    %234 = vmatpush.bf16.msra.mxu0 %v215
    %235 = vmatpush.bf16.msra.mxu0 %v214
    %236 = vmatpush.bf16.msra.mxu0 %v213
    %237 = vmatmul.bf16.gmra.mxu0 %v227
    %v238 = vpop.f32.mrf.mxu0
    %v239 = vadd.f32 %v188, %v238
    %v240 = vpop.f32.mrf.mxu0
    %v241 = vadd.f32 %v188, %v240
    %242 = vdwg.mxu0
    %v243 = vmax.f32 %v239, 0.0
    %v244 = vmax.f32 %v241, 0.0
    %v245 = vpack.c.bf16 %v244, %v243
    %v246 = vperm.slane %v53, 0
    %v251 = vunpack.c.l.b16 %v48
    %v252 = vunpack.c.l.b16 %v49
    %v253 = vunpack.c.l.b16 %v50
    %v254 = vunpack.c.l.b16 %v51
    %v255 = vpack.c.b16 %v252, %v251
    %v256 = vpack.c.b16 %v254, %v253
    %v260 = vsel %vm181, %v245, 0
    %262 = vmatpush.bf16.msra.mxu0 0
    %263 = vmatpush.bf16.msra.mxu0 0
    %264 = vmatpush.bf16.msra.mxu0 0
    %265 = vmatpush.bf16.msra.mxu0 0
    %266 = vmatpush.bf16.msra.mxu0 0
    %267 = vmatpush.bf16.msra.mxu0 0
    %268 = vmatpush.bf16.msra.mxu0 %v256
    %269 = vmatpush.bf16.msra.mxu0 %v255
    %270 = vmatmul.bf16.gmra.mxu0 %v260
    %v271 = vpop.f32.mrf.mxu0
    %v272 = vadd.f32 %v246, %v271
    %v273 = vpop.f32.mrf.mxu0
    %v274 = vadd.f32 %v246, %v273
    %275 = vdwg.mxu0
    %v276 = vadd.f32 %v272, %v16
    %v277 = vadd.f32 %v274, %v17
    %v278 = vmax.f32 %v276, 0.0
    %v279 = vmax.f32 %v277, 0.0
    %280 = vst [vmem:[#allocation2] sm:$0xff] %v278
    %281 = vst [vmem:[#allocation2 + $0x8] sm:$0xff] %v279
    // Predicated region
    $region14: #{tpu_custom_call.1} parent=1 // pred_check
      _
    $region15: #{tpu_custom_call.1} parent=1 // pred_check_branch
      %283 = sbr.rel (0) target = $region17
    $region16: #{tpu_custom_call.1} parent=1 // pred_region
      %285 = vsyncadd [#allocation3], 0
      %s286 = sshll.u32 [#allocation2], 4
      %s287 = int_to_ptr.vmem [resolvable:$true] %s286
      %s288 = sshll.u32 %s3, 4
      %s289 = int_to_ptr.hbm [resolvable:$true] %s288
      %294 = dma.vmem_to_hbm [thread:$0]  %s287, 256, %s289, [#allocation3], 128, 128, 8
    $region17: #{tpu_custom_call.1} parent=1 // pred_fallthru
      _
    // Predicated region
    $region18: #{tpu_custom_call.1} parent=1 // pred_check
      _
    $region19: #{tpu_custom_call.1} parent=1 // pred_check_branch
      %296 = sbr.rel (0) target = $region21
    $region20: #{tpu_custom_call.1} parent=1 // pred_region
      %298 = dma.done [#allocation3], 256
    $region21: #{tpu_custom_call.1} parent=1 // pred_fallthru
      _
    %299 = vsyncpa [#allocation3], 1

</llo_original>
